<compile_context>
chip_gen: v7x
topology: tpu7x:2x2x1
jax: 0.10.0
libtpu: 0.0.40
codegen_flags: <defaults>
</compile_context>

<pallas_src>
import jax
import jax.numpy as jnp
from jax.experimental import pallas as pl
from jax.experimental.pallas import tpu as pltpu


_VMEM_BUDGET = 24 * 1024 * 1024            # working-set target (covers v7x 64 MiB part)
_VMEM_LIMIT = 32 * 1024 * 1024             # explicit scoped-VMEM limit passed to Mosaic
_MAX_POOL_MATRIX_BYTES = 4 * 1024 * 1024   # cap on the "combined" pooling matrix


def _sublane_multiple(dtype):
    """Minimum second-minor block multiple: 8 rows per 32-bit sublane, packed dtypes more."""
    return 8 * max(1, 4 // jnp.dtype(dtype).itemsize)


def _make_kernel(inv_scale, compute_rows, out_rows, n_compute_blocks, has_zero_blocks):
    """One MXU matmul + stores.  The first `compute_rows` rows of the output block hold pooled
    data; any remaining rows (zero-padded channels fused into the same block) are memset."""

    def _compute(x_ref, p_ref, o_ref):
        # Native-dtype operands straight into the MXU; accumulate in f32 (no VPU upcast pass).
        y = jnp.dot(x_ref[...], p_ref[...], preferred_element_type=jnp.float32)
        y = (y * inv_scale).astype(o_ref.dtype)        # exact f32 scalar 1/s^3
        o_ref[0:compute_rows, :] = y
        if compute_rows < out_rows:                    # fused channel zero-padding
            o_ref[compute_rows:, :] = jnp.zeros(
                (out_rows - compute_rows, o_ref.shape[-1]), o_ref.dtype)

    def _zeros(o_ref):
        o_ref[...] = jnp.zeros_like(o_ref)

    def kernel(x_ref, p_ref, o_ref):
        if has_zero_blocks:
            j = pl.program_id(1)

            @pl.when(j < n_compute_blocks)
            def _():
                _compute(x_ref, p_ref, o_ref)

            @pl.when(j >= n_compute_blocks)
            def _():
                _zeros(o_ref)
        else:
            _compute(x_ref, p_ref, o_ref)

    return kernel


def _pick_channel_block(C_in, num_filters, rows_in, rows_out, lanes_in, lanes_out,
                        itemsize, p_bytes, sub, min_blocks):
    """Largest channel block cb with cb | C_in, cb | num_filters, dtype-aware sublane-aligned
    block rows, >= min_blocks output blocks, and a double-buffered working set (inputs +
    outputs + constant pooling matrix, all counted twice) inside the VMEM budget."""
    for cb in range(C_in, 0, -1):
        if C_in % cb or num_filters % cb:
            continue
        if num_filters // cb < min_blocks:
            continue
        if (cb * rows_in) % sub or (cb * rows_out) % sub:
            continue
        use = 2 * cb * (rows_in * lanes_in + rows_out * lanes_out) * itemsize + 2 * p_bytes
        if use <= _VMEM_BUDGET:
            return cb
    return None


def avg_pool_padding(x, num_filters, stride):
    """Pallas implementation of AvgPoolPadding.forward for 5-D NCDHW input."""
    N, C_in, D, H, W = x.shape
    s = int(stride)
    assert num_filters >= C_in, "num_zeros must be non-negative"
    assert D % s == 0 and H % s == 0 and W % s == 0, "spatial dims must divide the stride"
    Do, Ho, Wo = D // s, H // s, W // s
    dtype = x.dtype
    itemsize = jnp.dtype(dtype).itemsize
    sub = _sublane_multiple(dtype)
    inv_scale = 1.0 / float(s ** 3)

    HW, HoWo = H * W, Ho * Wo
    DHW, DoHoWo = D * HW, Do * HoWo

    # ---- layout mode --------------------------------------------------------------------
    combined = (HoWo < 128) and (DHW * DoHoWo * itemsize <= _MAX_POOL_MATRIX_BYTES)
    if combined:
        # rows = (n, c), lanes = (d, h, w): lane-dense output, one (DHW, DoHoWo) 0/1 matrix.
        x_view = x.reshape(N, C_in, DHW)
        rows_in, rows_out = 1, 1
        lanes_in, lanes_out = DHW, DoHoWo
        grp = ((((jnp.arange(D) // s)[:, None, None]) * Ho
                + (jnp.arange(H) // s)[None, :, None]) * Wo
               + (jnp.arange(W) // s)[None, None, :]).reshape(DHW)
        p = (grp[:, None] == jnp.arange(DoHoWo)[None, :]).astype(dtype)
    else:
        # rows = (n, c, do), lanes = (dj, h, w): the intra-window depth offset dj lives on the
        # lane axis, so pooling is still one matmul; the matrix is only s x the plain (HW,HoWo)
        # matrix and there is no O(cb^2) block-diagonal D-pooling matrix.
        x_view = x.reshape(N, C_in * Do, s * HW)
        rows_in, rows_out = Do, Do
        lanes_in, lanes_out = s * HW, HoWo
        grp_hw = ((jnp.arange(H) // s)[:, None] * Wo
                  + (jnp.arange(W) // s)[None, :]).reshape(HW)
        grp = jnp.tile(grp_hw, s)              # depth offset does not change the output group
        p = (grp[:, None] == jnp.arange(HoWo)[None, :]).astype(dtype)
    p_bytes = p.shape[0] * p.shape[1] * itemsize

    # ---- channel blocking ---------------------------------------------------------------
    full_use = (2 * (C_in * rows_in * lanes_in + num_filters * rows_out * lanes_out) * itemsize
                + 2 * p_bytes)
    cb = None
    if full_use > _VMEM_BUDGET or N == 1:
        # Case B: tile the channel dim.  When N == 1 insist on >= 2 channel blocks so the
        # second grid axis can feed both v7x TensorCores.
        cb = _pick_channel_block(C_in, num_filters, rows_in, rows_out, lanes_in, lanes_out,
                                 itemsize, p_bytes, sub,
                                 min_blocks=2 if (N == 1 and num_filters > 1) else 1)

    if cb is None:
        # Case A: one block per batch item spanning the FULL channel extents (input C_in,
        # output num_filters) -> block dims equal the array dims (always layout-legal), and
        # the zero-padded channels are written by the same kernel invocation.
        # TODO(synk): a single-batch channel slab larger than the VMEM budget with no legal
        # channel tiling would additionally need D/H tiling; we rely on vmem_limit_bytes.
        grid = (N, 1)
        n_compute_blocks, has_zero_blocks = 1, False
        in_rows_blk = C_in * rows_in
        out_rows_blk = num_filters * rows_out
        compute_rows = C_in * rows_out
        in_index = lambda n, j: (n, 0, 0)
        out_index = lambda n, j: (n, 0, 0)
    else:
        # Case B: channel blocks never mix real and zero channels (cb | C_in, cb | num_filters);
        # trailing output blocks are write-only zero blocks.  Their input index is clamped to
        # the last real block so no extra input DMA is issued (same-index blocks are not
        # re-fetched by the pipeline).
        n_compute_blocks = C_in // cb
        grid = (N, num_filters // cb)
        has_zero_blocks = grid[1] > n_compute_blocks
        in_rows_blk = cb * rows_in
        out_rows_blk = cb * rows_out
        compute_rows = cb * rows_out
        last = n_compute_blocks - 1
        in_index = lambda n, j: (n, jnp.minimum(j, last), 0)
        out_index = lambda n, j: (n, j, 0)

    kernel = _make_kernel(inv_scale, compute_rows, out_rows_blk,
                          n_compute_blocks, has_zero_blocks)

    out = pl.pallas_call(
        kernel,
        out_shape=jax.ShapeDtypeStruct((N, num_filters * rows_out, lanes_out), dtype),
        grid=grid,
        in_specs=[
            pl.BlockSpec((None, in_rows_blk, lanes_in), in_index),
            pl.BlockSpec(p.shape, lambda n, j: (0, 0)),   # constant block: fetched once
        ],
        out_specs=pl.BlockSpec((None, out_rows_blk, lanes_out), out_index),
        compiler_params=pltpu.CompilerParams(
            dimension_semantics=("parallel", "parallel"),
            vmem_limit_bytes=_VMEM_LIMIT,
        ),
    )(x_view, p)

    return out.reshape(N, num_filters, Do, Ho, Wo)


def _reference(x, num_filters, s):
    """Pure-JAX reference matching F.pad(channel) + AvgPool3d(s, stride=s)."""
    N, C, D, H, W = x.shape
    xp = jnp.pad(x, ((0, 0), (0, num_filters - C), (0, 0), (0, 0), (0, 0)))
    r = xp.reshape(N, num_filters, D // s, s, H // s, s, W // s, s)
    return r.mean(axis=(3, 5, 7))


def _check(x, num_filters, stride):
    out = jax.block_until_ready(avg_pool_padding(x, num_filters, stride))
    exp = _reference(x, num_filters, stride)
    C_in = x.shape[1]
    assert out.shape == exp.shape
    # f32 MXU matmuls at default precision may run as bf16 passes; tolerance sized for that.
    assert jnp.allclose(out, exp, atol=1e-2, rtol=1e-2), "pooled values mismatch"
    assert jnp.all(out[:, C_in:] == 0), "padded channels must be exactly zero"


if __name__ == "__main__":
    key = jax.random.PRNGKey(0)
    k1, k2 = jax.random.split(key)

    # Small NCDHW shape consistent with the module: channels_in=4, num_filters=8, stride=2.
    # Ho*Wo = 16 < 128  -> "combined" lane-dense layout.
    x1 = jax.random.normal(k1, (2, 4, 8, 8, 8), dtype=jnp.float32)
    _check(x1, num_filters=8, stride=2)

    # Larger spatial plane (Ho*Wo = 256 >= 128) -> "split" layout path.
    x2 = jax.random.normal(k2, (2, 4, 4, 32, 32), dtype=jnp.float32)
    _check(x2, num_filters=8, stride=2)

    print("KERNEL_OK")
</pallas_src>

<mosaic_0001>
module attributes {stable_mosaic.version = 11 : i64} {
  func.func @kernel(%arg0: i32, %arg1: i32, %arg2: memref<1x4x512xf32, #tpu.memory_space<vmem>>, %arg3: memref<512x64xf32, #tpu.memory_space<vmem>>, %arg4: memref<1x8x64xf32, #tpu.memory_space<vmem>>) attributes {dimension_semantics = [#tpu.dimension_semantics<parallel>, #tpu.dimension_semantics<parallel>], iteration_bounds = array<i64: 2, 1>, scalar_prefetch = 0 : i64, scratch_operands = 0 : i64, tpu.core_type = #tpu.core_type<tc>, window_params = [{transform_indices = @transform_0, window_bounds = array<i64: 1, 4, 512>}, {pipeline_mode = #tpu.pipeline_mode<synchronous>, transform_indices = @transform_1, window_bounds = array<i64: 512, 64>}, {transform_indices = @transform_2, window_bounds = array<i64: 1, 8, 64>}]} {
    %c0 = arith.constant 0 : index
    %c0_0 = arith.constant 0 : index
    %c0_1 = arith.constant 0 : index
    %0 = vector.load %arg2[%c0, %c0_0, %c0_1] : memref<1x4x512xf32, #tpu.memory_space<vmem>>, vector<1x4x512xf32>
    %1 = vector.shape_cast %0 : vector<1x4x512xf32> to vector<4x512xf32>
    %c0_2 = arith.constant 0 : index
    %c0_3 = arith.constant 0 : index
    %2 = vector.load %arg3[%c0_2, %c0_3] : memref<512x64xf32, #tpu.memory_space<vmem>>, vector<512x64xf32>
    %cst = arith.constant dense<0.000000e+00> : vector<4x64xf32>
    %3 = tpu.matmul %1, %2, %cst {dimension_numbers = #tpu.dot_dimension_numbers<[1], [0], [0], [1], [0, 0, 1, 1], [], []>} : vector<4x512xf32>, vector<512x64xf32>, vector<4x64xf32> -> vector<4x64xf32>
    %cst_4 = arith.constant 1.250000e-01 : f32
    %4 = vector.broadcast %cst_4 : f32 to vector<4x64xf32>
    %5 = arith.mulf %3, %4 : vector<4x64xf32>
    %c0_5 = arith.constant 0 : index
    %c0_6 = arith.constant 0 : index
    %c0_7 = arith.constant 0 : index
    %6 = vector.load %arg4[%c0_5, %c0_6, %c0_7] : memref<1x8x64xf32, #tpu.memory_space<vmem>>, vector<1x4x64xf32>
    %7 = vector.shape_cast %6 : vector<1x4x64xf32> to vector<4x64xf32>
    %8 = vector.shape_cast %5 : vector<4x64xf32> to vector<1x4x64xf32>
    tpu.vector_store %arg4[%c0_5, %c0_6, %c0_7], %8 {strides = array<i32>} : memref<1x8x64xf32, #tpu.memory_space<vmem>>, vector<1x4x64xf32>,
    %cst_8 = arith.constant 0.000000e+00 : f32
    %9 = vector.broadcast %cst_8 : f32 to vector<4x64xf32>
    %c0_9 = arith.constant 0 : index
    %c4 = arith.constant 4 : index
    %c0_10 = arith.constant 0 : index
    %10 = vector.load %arg4[%c0_9, %c4, %c0_10] : memref<1x8x64xf32, #tpu.memory_space<vmem>>, vector<1x4x64xf32>
    %11 = vector.shape_cast %10 : vector<1x4x64xf32> to vector<4x64xf32>
    %12 = vector.shape_cast %9 : vector<4x64xf32> to vector<1x4x64xf32>
    tpu.vector_store %arg4[%c0_9, %c4, %c0_10], %12 {strides = array<i32>} : memref<1x8x64xf32, #tpu.memory_space<vmem>>, vector<1x4x64xf32>,
    return
  }
  func.func @transform_0(%arg0: i32, %arg1: i32) -> (i32, i32, i32) {
    %c0_i32 = arith.constant 0 : i32
    %c0_i32_0 = arith.constant 0 : i32
    %c0_i32_1 = arith.constant 0 : i32
    return %arg0, %c0_i32, %c0_i32_0 : i32, i32, i32
  }
  func.func @transform_1(%arg0: i32, %arg1: i32) -> (i32, i32) {
    %c0_i32 = arith.constant 0 : i32
    %c0_i32_0 = arith.constant 0 : i32
    %c0_i32_1 = arith.constant 0 : i32
    return %c0_i32, %c0_i32_0 : i32, i32
  }
  func.func @transform_2(%arg0: i32, %arg1: i32) -> (i32, i32, i32) {
    %c0_i32 = arith.constant 0 : i32
    %c0_i32_0 = arith.constant 0 : i32
    %c0_i32_1 = arith.constant 0 : i32
    return %arg0, %c0_i32, %c0_i32_0 : i32, i32, i32
  }
}

</mosaic_0001>

<llo_original>
// kernel: tpu_custom_call.1
$region0: #{tpu_custom_call.1}
  #allocation0 [shape = 'u32[]', space=smem, size = 0x4, offset = 0x4, fixed_abs, tag = 'smem constant byte address 0x4 - core index']
  #allocation1 [shape = 'u32[144,128]{1,0:T(1,128)}', space=vmem, size = 0x12000, scoped, tag = 'internal scratch']
  %s0 = inlined_call_operand.vmem [shape: f32[2,4,512], index: 0, kind: input, shape index: {}]
  %s1 = inlined_call_operand.vmem [shape: f32[512,64], index: 1, kind: input, shape index: {}]
  %s2 = inlined_call_operand.hbm [shape: f32[2,8,64], index: 2, kind: output, shape index: {}]
  %s3 = sld [smem:[#allocation0]]
  $region41: #{tpu_custom_call.1} parent=0
    _
  %s5 = ssub.s32 1, %s3
  %s6 = scalar_select 0, %s5, %s3
  $region1: #{tpu_custom_call.1} parent=0
    #allocation2 [shape = 'u8[8192]{0}', space=vmem, size = 0x2000, scoped, tag = 'output window, operand 0']
    #allocation3 [shape = 's32[2]{0}', space=sflag, size = 0x8, scoped, tag = 'scoped memory for tpu_custom_call.1']
    %7 = vsyncpa [#allocation3], 0
    %s8 = scalar_lea.sflag [#allocation3], 1
    %9 = vsyncpa %s8, 0
    loop: start=0, step=1, limit=4
    $region2: #{tpu_custom_call.1} parent=1 // loop_pre_header
      _
    $region3: #{tpu_custom_call.1} parent=1 // loop_header
      %s11 = sphi 0, %s15
      %p12 = scmp.ge.s32.totalorder %s11, 4
      %s18 = sphi 0, %s30
      %s19 = sphi 0, %s26
      %s20 = sphi 0, %s18
      %s21 = sphi 0, %s19
      %s22 = sphi 0, %s20
      %s23 = sphi 0, %s21
      %s33 = sphi 0, %s35
      %s36 = sphi 0, %s33
      %s37 = sphi 0, %s36
      %s53 = sphi 0, %s37
      %s57 = sphi 0, %s57
      %s59 = sphi 0, %s57
      %s60 = sphi 0, %s59
      %s74 = sphi 0, %s60
      %s80 = sphi 0, %s82
      %s83 = sphi 0, %s80
      %s84 = sphi 0, %s83
      %s100 = sphi 0, %s84
    $region4: #{tpu_custom_call.1} parent=1 // loop_header_branch
      %14 = sbr.rel (%p12) target = $region8
    $region5: #{tpu_custom_call.1} parent=1 // loop_body
      %s16 = ssub.s32 %s11, 1
      %s17 = ssub.s32 %s11, 2
      %s24 = sadd.s32 1, %s19
      %p25 = scmp.ge.s32.totalorder %s24, 1
      %s26 = scalar_select %p25, 0, %s24
      %s27 = sadd.s32 1, %s18
      %s28 = scalar_select %p25, %s27, %s18
      %p29 = scmp.ge.s32.totalorder %s28, 2
      %s30 = scalar_select %p29, 0, %s28
      %s31 = ssub.s32 %s18, %s30
      %p32 = scmp.eq.s32.totalorder %s31, 0
      %s34 = sadd.s32 %s33, 1
      %s35 = scalar_select %p32, %s33, %s34
      %p38 = pneg %p32
      %p39 = scmp.eq.s32.totalorder %s11, 1
      %p40 = por %p38, %p39
      %p41 = scmp.ne.s32.totalorder %s33, %s36
      %p42 = scmp.eq.s32.totalorder %s11, 0
      %p43 = por %p41, %p42
      %p44 = scmp.ne.s32.totalorder %s33, %s36
      %p45 = scmp.eq.s32.totalorder %s16, 1
      %p46 = por %p44, %p45
      %p47 = scmp.ne.s32.totalorder %s36, %s37
      %p48 = scmp.eq.s32.totalorder %s16, 0
      %p49 = por %p47, %p48
      %p50 = scmp.ne.s32.totalorder %s36, %s37
      %p51 = scmp.eq.s32.totalorder %s17, 1
      %p52 = por %p50, %p51
      %p54 = scmp.ne.s32.totalorder %s37, %s53
      %p55 = scmp.eq.s32.totalorder %s17, 0
      %p56 = por %p54, %p55
      %s58 = sadd.s32 %s57, 1
      %p61 = scmp.eq.s32.totalorder %s11, 1
      %p62 = scmp.ne.s32.totalorder %s57, %s59
      %p63 = scmp.eq.s32.totalorder %s11, 0
      %p64 = por %p62, %p63
      %p65 = scmp.ne.s32.totalorder %s57, %s59
      %p66 = scmp.eq.s32.totalorder %s16, 1
      %p67 = por %p65, %p66
      %p68 = scmp.ne.s32.totalorder %s59, %s60
      %p69 = scmp.eq.s32.totalorder %s16, 0
      %p70 = por %p68, %p69
      %p71 = scmp.ne.s32.totalorder %s59, %s60
      %p72 = scmp.eq.s32.totalorder %s17, 1
      %p73 = por %p71, %p72
      %p75 = scmp.ne.s32.totalorder %s60, %s74
      %p76 = scmp.eq.s32.totalorder %s17, 0
      %p77 = por %p75, %p76
      %s78 = ssub.s32 %s18, %s30
      %p79 = scmp.eq.s32.totalorder %s78, 0
      %s81 = sadd.s32 %s80, 1
      %s82 = scalar_select %p79, %s80, %s81
      %p85 = pneg %p79
      %p86 = scmp.eq.s32.totalorder %s11, 1
      %p87 = por %p85, %p86
      %p88 = scmp.ne.s32.totalorder %s80, %s83
      %p89 = scmp.eq.s32.totalorder %s11, 0
      %p90 = por %p88, %p89
      %p91 = scmp.ne.s32.totalorder %s80, %s83
      %p92 = scmp.eq.s32.totalorder %s16, 1
      %p93 = por %p91, %p92
      %p94 = scmp.ne.s32.totalorder %s83, %s84
      %p95 = scmp.eq.s32.totalorder %s16, 0
      %p96 = por %p94, %p95
      %p97 = scmp.ne.s32.totalorder %s83, %s84
      %p98 = scmp.eq.s32.totalorder %s17, 1
      %p99 = por %p97, %p98
      %p101 = scmp.ne.s32.totalorder %s84, %s100
      %p102 = scmp.eq.s32.totalorder %s17, 0
      %p103 = por %p101, %p102
      %p104 = scmp.le.s32.totalorder 1, %s11
      %p105 = scmp.lt.s32.totalorder %s11, 3
      %p106 = pnand %p104, %p105
      %p107 = pneg %p106
      // Predicated region
      $region9: #{tpu_custom_call.1} parent=5 // pred_check
        _
      $region10: #{tpu_custom_call.1} parent=5 // pred_check_branch
        %109 = sbr.rel (%p106) target = $region12
      $region11: #{tpu_custom_call.1} parent=5 // pred_region
        %s110 = ssub.s32 %s11, 1
        // Predicated region
        $region13: #{tpu_custom_call.1} parent=11 // pred_check
          %p111 = pneg %p70
        $region14: #{tpu_custom_call.1} parent=11 // pred_check_branch
          %113 = sbr.rel (%p111) target = $region16
        $region15: #{tpu_custom_call.1} parent=11 // pred_region
          _
        $region16: #{tpu_custom_call.1} parent=11 // pred_fallthru
          _
      $region12: #{tpu_custom_call.1} parent=5 // pred_fallthru
        _
      %p114 = scmp.lt.s32.totalorder %s11, 2
      // Predicated region
      $region17: #{tpu_custom_call.1} parent=5 // pred_check
        %p115 = pneg %p114
      $region18: #{tpu_custom_call.1} parent=5 // pred_check_branch
        %117 = sbr.rel (%p115) target = $region20
      $region19: #{tpu_custom_call.1} parent=5 // pred_region
        // Predicated region
        $region21: #{tpu_custom_call.1} parent=19 // pred_check
          %p118 = pneg %p43
        $region22: #{tpu_custom_call.1} parent=19 // pred_check_branch
          %120 = sbr.rel (%p118) target = $region24
        $region23: #{tpu_custom_call.1} parent=19 // pred_region
          %p121 = scmp.lt.s32.totalorder %s18, 1
          %s122 = scalar_select %p121, %s18, 1
          %s123 = smul.addr %s122, 4
          %s124 = smul.addr %s123, 4
          %s125 = scalar_lea.vmem %s0, %s124
        $region24: #{tpu_custom_call.1} parent=19 // pred_fallthru
          _
      $region20: #{tpu_custom_call.1} parent=5 // pred_fallthru
        _
      %p126 = scmp.le.s32.totalorder 1, %s11
      %p127 = scmp.lt.s32.totalorder %s11, 3
      %p128 = pnand %p126, %p127
      %p129 = pneg %p128
      // Predicated region
      $region25: #{tpu_custom_call.1} parent=5 // pred_check
        _
      $region26: #{tpu_custom_call.1} parent=5 // pred_check_branch
        %131 = sbr.rel (%p128) target = $region28
      $region27: #{tpu_custom_call.1} parent=5 // pred_region
        %s132 = ssub.s32 %s11, 1
        %p133 = scmp.lt.s32.totalorder %s20, 1
        %s134 = scalar_select %p133, %s20, 1
        %s135 = smul.addr %s134, 4
        %s136 = smul.addr %s135, 4
        %s137 = scalar_lea.vmem %s0, %s136
        %p138 = pneg %p49
        %p139 = pneg %p46
        %p140 = pneg %p70
        %p141 = pneg %p67
        %p142 = pneg %p96
        %p143 = pneg %p93
        %s144 = sand.u32 %s83, 1
        %s145 = scalar_lea.sflag [#allocation3], %s144
        %s146 = sand.u32 %s83, 1
        %s147 = smul.addr %s146, 8
        %s148 = scalar_lea.vmem [#allocation2], %s147
        %p149 = scmp.lt.s32.totalorder %s20, 1
        %s150 = scalar_select %p149, %s20, 1
        %s151 = smul.addr %s150, 4
        %s152 = smul.addr %s151, 4
        %s153 = scalar_lea.vmem %s0, %s152
        %v154 = vld [vmem:[%s153] sm:$0xff]
        %v155 = vld [vmem:[%s153 + $0x8] sm:$0xff]
        %v156 = vld [vmem:[%s1] sm:$0xff]
        %v157 = vld [vmem:[%s1 + $0x8] sm:$0xff]
        %v158 = vld [vmem:[%s1 + $0x10] sm:$0xff]
        %v159 = vld [vmem:[%s1 + $0x18] sm:$0xff]
        %v160 = vld [vmem:[%s1 + $0x20] sm:$0xff]
        %v161 = vld [vmem:[%s1 + $0x28] sm:$0xff]
        %v162 = vld [vmem:[%s1 + $0x30] sm:$0xff]
        %v163 = vld [vmem:[%s1 + $0x38] sm:$0xff]
        %v164 = vld [vmem:[%s1 + $0x40] sm:$0xff]
        %v165 = vld [vmem:[%s1 + $0x48] sm:$0xff]
        %v166 = vld [vmem:[%s1 + $0x50] sm:$0xff]
        %v167 = vld [vmem:[%s1 + $0x58] sm:$0xff]
        %v168 = vld [vmem:[%s1 + $0x60] sm:$0xff]
        %v169 = vld [vmem:[%s1 + $0x68] sm:$0xff]
        %v170 = vld [vmem:[%s1 + $0x70] sm:$0xff]
        %v171 = vld [vmem:[%s1 + $0x78] sm:$0xff]
        %v172 = vld [vmem:[%s1 + $0x80] sm:$0xff]
        %v173 = vld [vmem:[%s1 + $0x88] sm:$0xff]
        %v174 = vld [vmem:[%s1 + $0x90] sm:$0xff]
        %v175 = vld [vmem:[%s1 + $0x98] sm:$0xff]
        %v176 = vld [vmem:[%s1 + $0xa0] sm:$0xff]
        %v177 = vld [vmem:[%s1 + $0xa8] sm:$0xff]
        %v178 = vld [vmem:[%s1 + $0xb0] sm:$0xff]
        %v179 = vld [vmem:[%s1 + $0xb8] sm:$0xff]
        %v180 = vld [vmem:[%s1 + $0xc0] sm:$0xff]
        %v181 = vld [vmem:[%s1 + $0xc8] sm:$0xff]
        %v182 = vld [vmem:[%s1 + $0xd0] sm:$0xff]
        %v183 = vld [vmem:[%s1 + $0xd8] sm:$0xff]
        %v184 = vld [vmem:[%s1 + $0xe0] sm:$0xff]
        %v185 = vld [vmem:[%s1 + $0xe8] sm:$0xff]
        %v186 = vld [vmem:[%s1 + $0xf0] sm:$0xff]
        %v187 = vld [vmem:[%s1 + $0xf8] sm:$0xff]
        %v188 = vld [vmem:[%s1 + $0x100] sm:$0xff]
        %v189 = vld [vmem:[%s1 + $0x108] sm:$0xff]
        %v190 = vld [vmem:[%s1 + $0x110] sm:$0xff]
        %v191 = vld [vmem:[%s1 + $0x118] sm:$0xff]
        %v192 = vld [vmem:[%s1 + $0x120] sm:$0xff]
        %v193 = vld [vmem:[%s1 + $0x128] sm:$0xff]
        %v194 = vld [vmem:[%s1 + $0x130] sm:$0xff]
        %v195 = vld [vmem:[%s1 + $0x138] sm:$0xff]
        %v196 = vld [vmem:[%s1 + $0x140] sm:$0xff]
        %v197 = vld [vmem:[%s1 + $0x148] sm:$0xff]
        %v198 = vld [vmem:[%s1 + $0x150] sm:$0xff]
        %v199 = vld [vmem:[%s1 + $0x158] sm:$0xff]
        %v200 = vld [vmem:[%s1 + $0x160] sm:$0xff]
        %v201 = vld [vmem:[%s1 + $0x168] sm:$0xff]
        %v202 = vld [vmem:[%s1 + $0x170] sm:$0xff]
        %v203 = vld [vmem:[%s1 + $0x178] sm:$0xff]
        %v204 = vld [vmem:[%s1 + $0x180] sm:$0xff]
        %v205 = vld [vmem:[%s1 + $0x188] sm:$0xff]
        %v206 = vld [vmem:[%s1 + $0x190] sm:$0xff]
        %v207 = vld [vmem:[%s1 + $0x198] sm:$0xff]
        %v208 = vld [vmem:[%s1 + $0x1a0] sm:$0xff]
        %v209 = vld [vmem:[%s1 + $0x1a8] sm:$0xff]
        %v210 = vld [vmem:[%s1 + $0x1b0] sm:$0xff]
        %v211 = vld [vmem:[%s1 + $0x1b8] sm:$0xff]
        %v212 = vld [vmem:[%s1 + $0x1c0] sm:$0xff]
        %v213 = vld [vmem:[%s1 + $0x1c8] sm:$0xff]
        %v214 = vld [vmem:[%s1 + $0x1d0] sm:$0xff]
        %v215 = vld [vmem:[%s1 + $0x1d8] sm:$0xff]
        %v216 = vld [vmem:[%s1 + $0x1e0] sm:$0xff]
        %v217 = vld [vmem:[%s1 + $0x1e8] sm:$0xff]
        %v218 = vld [vmem:[%s1 + $0x1f0] sm:$0xff]
        %v219 = vld [vmem:[%s1 + $0x1f8] sm:$0xff]
        %v222 = vcombine.high %v154, %v154
        %v223 = vcombine.high %v155, %v155
        %226 = vmatprep.subr.mxu0 0.0
        %227 = vmatpush1.msra.mxu0 %v156
        %228 = vmatprep.subr.mxu0 0.0
        %229 = vmatpush1.msra.mxu0 %v157
        %230 = vmatprep.subr.mxu0 0.0
        %231 = vmatpush1.msra.mxu0 %v158
        %232 = vmatprep.subr.mxu0 0.0
        %233 = vmatpush1.msra.mxu0 %v159
        %234 = vmatprep.subr.mxu0 0.0
        %235 = vmatpush1.msra.mxu0 %v160
        %236 = vmatprep.subr.mxu0 0.0
        %237 = vmatpush1.msra.mxu0 %v161
        %238 = vmatprep.subr.mxu0 0.0
        %239 = vmatpush1.msra.mxu0 %v162
        %240 = vmatprep.subr.mxu0 0.0
        %241 = vmatpush1.msra.mxu0 %v163
        %242 = vmatprep.subr.mxu0 0.0
        %243 = vmatpush1.msra.mxu0 %v164
        %244 = vmatprep.subr.mxu0 0.0
        %245 = vmatpush1.msra.mxu0 %v165
        %246 = vmatprep.subr.mxu0 0.0
        %247 = vmatpush1.msra.mxu0 %v166
        %248 = vmatprep.subr.mxu0 0.0
        %249 = vmatpush1.msra.mxu0 %v167
        %250 = vmatprep.subr.mxu0 0.0
        %251 = vmatpush1.msra.mxu0 %v168
        %252 = vmatprep.subr.mxu0 0.0
        %253 = vmatpush1.msra.mxu0 %v169
        %254 = vmatprep.subr.mxu0 0.0
        %255 = vmatpush1.msra.mxu0 %v170
        %256 = vmatprep.subr.mxu0 0.0
        %257 = vmatpush1.msra.mxu0 %v171
        %258 = vmatprep.subr.mxu0 0.0
        %259 = vmatpush1.msra.mxu0 %v172
        %260 = vmatprep.subr.mxu0 0.0
        %261 = vmatpush1.msra.mxu0 %v173
        %262 = vmatprep.subr.mxu0 0.0
        %263 = vmatpush1.msra.mxu0 %v174
        %264 = vmatprep.subr.mxu0 0.0
        %265 = vmatpush1.msra.mxu0 %v175
        %266 = vmatprep.subr.mxu0 0.0
        %267 = vmatpush1.msra.mxu0 %v176
        %268 = vmatprep.subr.mxu0 0.0
        %269 = vmatpush1.msra.mxu0 %v177
        %270 = vmatprep.subr.mxu0 0.0
        %271 = vmatpush1.msra.mxu0 %v178
        %272 = vmatprep.subr.mxu0 0.0
        %273 = vmatpush1.msra.mxu0 %v179
        %274 = vmatprep.subr.mxu0 0.0
        %275 = vmatpush1.msra.mxu0 %v180
        %276 = vmatprep.subr.mxu0 0.0
        %277 = vmatpush1.msra.mxu0 %v181
        %278 = vmatprep.subr.mxu0 0.0
        %279 = vmatpush1.msra.mxu0 %v182
        %280 = vmatprep.subr.mxu0 0.0
        %281 = vmatpush1.msra.mxu0 %v183
        %282 = vmatprep.subr.mxu0 0.0
        %283 = vmatpush1.msra.mxu0 %v184
        %284 = vmatprep.subr.mxu0 0.0
        %285 = vmatpush1.msra.mxu0 %v185
        %286 = vmatprep.subr.mxu0 0.0
        %287 = vmatpush1.msra.mxu0 %v186
        %288 = vmatprep.subr.mxu0 0.0
        %289 = vmatpush1.msra.mxu0 %v187
        %290 = vmatprep.mubr.f32.mxu0 %v222
        %291 = vmatmul.mubr.f32.gmra.mrb[0].mxu0 %v154
        %v292 = vpop.f32.mrb[0].mxu0
        %v293 = vadd.f32 0.0, %v292
        %v294 = vpop.f32.mrb[0].mxu0
        %295 = vdwg.mxu0
        %296 = vmatprep.subr.mxu0 0.0
        %297 = vmatpush1.msra.mxu0 %v188
        %298 = vmatprep.subr.mxu0 0.0
        %299 = vmatpush1.msra.mxu0 %v189
        %300 = vmatprep.subr.mxu0 0.0
        %301 = vmatpush1.msra.mxu0 %v190
        %302 = vmatprep.subr.mxu0 0.0
        %303 = vmatpush1.msra.mxu0 %v191
        %304 = vmatprep.subr.mxu0 0.0
        %305 = vmatpush1.msra.mxu0 %v192
        %306 = vmatprep.subr.mxu0 0.0
        %307 = vmatpush1.msra.mxu0 %v193
        %308 = vmatprep.subr.mxu0 0.0
        %309 = vmatpush1.msra.mxu0 %v194
        %310 = vmatprep.subr.mxu0 0.0
        %311 = vmatpush1.msra.mxu0 %v195
        %312 = vmatprep.subr.mxu0 0.0
        %313 = vmatpush1.msra.mxu0 %v196
        %314 = vmatprep.subr.mxu0 0.0
        %315 = vmatpush1.msra.mxu0 %v197
        %316 = vmatprep.subr.mxu0 0.0
        %317 = vmatpush1.msra.mxu0 %v198
        %318 = vmatprep.subr.mxu0 0.0
        %319 = vmatpush1.msra.mxu0 %v199
        %320 = vmatprep.subr.mxu0 0.0
        %321 = vmatpush1.msra.mxu0 %v200
        %322 = vmatprep.subr.mxu0 0.0
        %323 = vmatpush1.msra.mxu0 %v201
        %324 = vmatprep.subr.mxu0 0.0
        %325 = vmatpush1.msra.mxu0 %v202
        %326 = vmatprep.subr.mxu0 0.0
        %327 = vmatpush1.msra.mxu0 %v203
        %328 = vmatprep.subr.mxu0 0.0
        %329 = vmatpush1.msra.mxu0 %v204
        %330 = vmatprep.subr.mxu0 0.0
        %331 = vmatpush1.msra.mxu0 %v205
        %332 = vmatprep.subr.mxu0 0.0
        %333 = vmatpush1.msra.mxu0 %v206
        %334 = vmatprep.subr.mxu0 0.0
        %335 = vmatpush1.msra.mxu0 %v207
        %336 = vmatprep.subr.mxu0 0.0
        %337 = vmatpush1.msra.mxu0 %v208
        %338 = vmatprep.subr.mxu0 0.0
        %339 = vmatpush1.msra.mxu0 %v209
        %340 = vmatprep.subr.mxu0 0.0
        %341 = vmatpush1.msra.mxu0 %v210
        %342 = vmatprep.subr.mxu0 0.0
        %343 = vmatpush1.msra.mxu0 %v211
        %344 = vmatprep.subr.mxu0 0.0
        %345 = vmatpush1.msra.mxu0 %v212
        %346 = vmatprep.subr.mxu0 0.0
        %347 = vmatpush1.msra.mxu0 %v213
        %348 = vmatprep.subr.mxu0 0.0
        %349 = vmatpush1.msra.mxu0 %v214
        %350 = vmatprep.subr.mxu0 0.0
        %351 = vmatpush1.msra.mxu0 %v215
        %352 = vmatprep.subr.mxu0 0.0
        %353 = vmatpush1.msra.mxu0 %v216
        %354 = vmatprep.subr.mxu0 0.0
        %355 = vmatpush1.msra.mxu0 %v217
        %356 = vmatprep.subr.mxu0 0.0
        %357 = vmatpush1.msra.mxu0 %v218
        %358 = vmatprep.subr.mxu0 0.0
        %359 = vmatpush1.msra.mxu0 %v219
        %360 = vmatprep.mubr.f32.mxu0 %v223
        %361 = vmatmul.mubr.f32.gmra.mrb[0].mxu0 %v155
        %v362 = vpop.f32.mrb[0].mxu0
        %v363 = vadd.f32 %v293, %v362
        %v364 = vpop.f32.mrb[0].mxu0
        %365 = vdwg.mxu0
        %v366 = vmul.f32 %v363, 0.125
        %vm367 = vcmask 519168
        %368 = vst.msk [vmem:[%s148] sm:$0xf] %vm367, %v366
        %369 = vst.msk [vmem:[%s148 + $0x4] sm:$0xf] %vm367, 0.0
        %s370 = sand.u32 %s83, 1
        %s371 = scalar_lea.sflag [#allocation3], %s370
        %s372 = sand.u32 %s83, 1
        %s373 = smul.addr %s372, 8
        %s374 = scalar_lea.vmem [#allocation2], %s373
        // Predicated region
        $region29: #{tpu_custom_call.1} parent=27 // pred_check
          %p375 = pneg %p93
        $region30: #{tpu_custom_call.1} parent=27 // pred_check_branch
          %377 = sbr.rel (%p375) target = $region32
        $region31: #{tpu_custom_call.1} parent=27 // pred_region
          %s379 = ssub.s32 128, 128
          %380 = vsyncadd %s371, %s379
          %s381 = smul.addr %s20, 128
          %s382 = scalar_lea.hbm %s2, %s381
          %s384 = sshll.u32 %s374, 4
          %s385 = int_to_ptr.vmem [resolvable:$true] %s384
          %387 = dma.vmem_to_hbm [thread:$0]  %s385, 128, %s382, %s371
        $region32: #{tpu_custom_call.1} parent=27 // pred_fallthru
          _
      $region28: #{tpu_custom_call.1} parent=5 // pred_fallthru
        _
      %p388 = scmp.le.s32.totalorder 2, %s11
      // Predicated region
      $region33: #{tpu_custom_call.1} parent=5 // pred_check
        %p389 = pneg %p388
      $region34: #{tpu_custom_call.1} parent=5 // pred_check_branch
        %391 = sbr.rel (%p389) target = $region36
      $region35: #{tpu_custom_call.1} parent=5 // pred_region
        %s392 = ssub.s32 %s11, 2
        // Predicated region
        $region37: #{tpu_custom_call.1} parent=35 // pred_check
          %p393 = pneg %p99
        $region38: #{tpu_custom_call.1} parent=35 // pred_check_branch
          %395 = sbr.rel (%p393) target = $region40
        $region39: #{tpu_custom_call.1} parent=35 // pred_region
          %s396 = sand.u32 %s84, 1
          %s397 = scalar_lea.sflag [#allocation3], %s396
          %s398 = sand.u32 %s84, 1
          %s399 = smul.addr %s398, 8
          %s400 = scalar_lea.vmem [#allocation2], %s399
          %401 = dma.done %s397, 128
        $region40: #{tpu_custom_call.1} parent=35 // pred_fallthru
          _
      $region36: #{tpu_custom_call.1} parent=5 // pred_fallthru
        _
    $region6: #{tpu_custom_call.1} parent=1 // loop_footer
      %s15 = sadd.s32 1, %s11
    $region7: #{tpu_custom_call.1} parent=1 // loop_footer_branch
      %10 = sbr.rel target = $region3
    $region8: #{tpu_custom_call.1} parent=1 // loop_exit
      _
    %402 = vsyncpa [#allocation3], 1
    %s403 = scalar_lea.sflag [#allocation3], 1
    %404 = vsyncpa %s403, 1

</llo_original>
